<compile_context>
chip_gen: v5e
topology: v5e:2x2
jax: 0.10.0
libtpu: 0.0.40
codegen_flags: <defaults>
</compile_context>

<pallas_src>
import jax
import jax.numpy as jnp
from jax.experimental import pallas as pl
from jax.experimental.pallas import tpu as pltpu


# ---------------------------------------------------------------------------
# Pallas kernel: per-batch-tile fused (conv-as-matmul -> ReLU -> GAP -> proj -> fc)
# ---------------------------------------------------------------------------
def _sfm_kernel(patches_ref, wc_ref, bc_ref, wp_ref, bp_ref, wf_ref, bf_ref,
                out_ref):
    # patches_ref block: (Bt, HW, KKC) bf16  -> current batch tile
    Bt, HW, KKC = patches_ref.shape
    Cmid = wc_ref.shape[1]

    # One large MXU matmul over the whole batch tile: M = Bt*HW, bf16 operands,
    # f32 accumulation.
    p = patches_ref[...].reshape(Bt * HW, KKC)                       # bf16
    conv = jnp.dot(p, wc_ref[...],
                   preferred_element_type=jnp.float32)               # [Bt*HW, Cmid] f32
    conv = jnp.maximum(conv + bc_ref[...], 0.0)                      # bias + ReLU (VPU, f32)

    # Global average pool as a plain sum; the 1/HW scale is folded into w_proj
    # host-side (legal: only linear ops follow the pool).
    gap = jnp.sum(conv.reshape(Bt, HW, Cmid), axis=1)                # [Bt, Cmid]

    # Backbone projection to visual_feature_dim (M = Bt).
    feat = jnp.dot(gap, wp_ref[...],
                   preferred_element_type=jnp.float32) + bp_ref[...]  # [Bt, Dfeat]
    feat = jnp.maximum(feat, 0.0)

    # VisionSFMNet.fc : Linear(visual_feature_dim, num_classes)
    preds = jnp.dot(feat, wf_ref[...],
                    preferred_element_type=jnp.float32) + bf_ref[...]  # [Bt, NC]

    out_ref[...] = preds                                              # block (Bt, NC)


# ---------------------------------------------------------------------------
# Glue: im2col (NHWC) + pallas_call wrapper
# ---------------------------------------------------------------------------
def _extract_patches_nhwc(x, k=3, pad=1):
    """x: [B, H, W, C] -> patches: [B, H*W, k*k*C] (kh, kw, c order)."""
    B, H, W, C = x.shape
    xp = jnp.pad(x, ((0, 0), (pad, pad), (pad, pad), (0, 0)))
    slabs = []
    for dh in range(k):
        for dw in range(k):
            slabs.append(xp[:, dh:dh + H, dw:dw + W, :])
    p = jnp.stack(slabs, axis=3)                 # [B, H, W, k*k, C]
    return p.reshape(B, H * W, k * k * C)


def _choose_batch_tile(B):
    """Largest sublane-friendly batch tile (<= 8) dividing B."""
    for bt in (8, 4, 2, 1):
        if bt <= B and B % bt == 0:
            return bt
    return 1


def vision_sfm_forward(img_1_nchw, img_2_nchw, params):
    """Equivalent of VisionSFMNet.forward(inputs) with loss=False, evaluate=False."""
    # NCHW (PyTorch) -> NHWC for the kernel.
    x1 = jnp.transpose(img_1_nchw, (0, 2, 3, 1)).astype(jnp.float32)
    x2 = jnp.transpose(img_2_nchw, (0, 2, 3, 1)).astype(jnp.float32)
    x = jnp.concatenate([x1, x2], axis=-1)       # [B, H, W, 2*Cin]

    # bf16 patches: halves HBM bytes on the (memory-bound) dominant operand.
    patches = _extract_patches_nhwc(x).astype(jnp.bfloat16)  # [B, HW, 9*2*Cin]
    B, HW, KKC = patches.shape

    w_conv = params["w_conv"].astype(jnp.bfloat16)            # MXU operand -> bf16
    b_conv = params["b_conv"].astype(jnp.float32)
    # Fold 1/HW GAP scale into the projection weights (kernel pools with a sum).
    w_proj = (params["w_proj"] / float(HW)).astype(jnp.float32)
    b_proj = params["b_proj"].astype(jnp.float32)
    w_fc = params["w_fc"].astype(jnp.float32)
    b_fc = params["b_fc"].astype(jnp.float32)

    Cmid = w_conv.shape[1]
    Dfeat = w_proj.shape[1]
    NC = w_fc.shape[1]

    Bt = _choose_batch_tile(B)

    out = pl.pallas_call(
        _sfm_kernel,
        out_shape=jax.ShapeDtypeStruct((B, NC), jnp.float32),
        grid=(B // Bt,),
        in_specs=[
            pl.BlockSpec((Bt, HW, KKC), lambda b: (b, 0, 0)),
            # Weights/biases: constant-index full blocks -> VMEM resident across
            # grid steps (total < 10 KB).
            pl.BlockSpec((KKC, Cmid), lambda b: (0, 0)),
            pl.BlockSpec((1, Cmid), lambda b: (0, 0)),
            pl.BlockSpec((Cmid, Dfeat), lambda b: (0, 0)),
            pl.BlockSpec((1, Dfeat), lambda b: (0, 0)),
            pl.BlockSpec((Dfeat, NC), lambda b: (0, 0)),
            pl.BlockSpec((1, NC), lambda b: (0, 0)),
        ],
        out_specs=pl.BlockSpec((Bt, NC), lambda b: (b, 0)),
        compiler_params=pltpu.CompilerParams(
            dimension_semantics=("parallel",),
            vmem_limit_bytes=32 * 1024 * 1024),
    )(patches, w_conv, b_conv, w_proj, b_proj, w_fc, b_fc)

    return out                                   # preds: [B, num_classes]


# ---------------------------------------------------------------------------
# Deterministic parameter construction (synthetic, matching module shapes)
# ---------------------------------------------------------------------------
def make_params(key, cin_per_img=4, cmid=16, visual_feature_dim=32,
                num_classes=8, k=3):
    kkc = k * k * (2 * cin_per_img)
    k1, k2, k3 = jax.random.split(key, 3)
    params = {
        # synthetic backbone
        "w_conv": jax.random.normal(k1, (kkc, cmid), jnp.float32) * 0.05,
        "b_conv": jnp.zeros((1, cmid), jnp.float32),
        "w_proj": jax.random.normal(k2, (cmid, visual_feature_dim),
                                    jnp.float32) * 0.05,
        "b_proj": jnp.zeros((1, visual_feature_dim), jnp.float32),
        # VisionSFMNet.fc : trunc_normal(mean=0, std=0.01), bias 0
        "w_fc": jax.random.truncated_normal(
            k3, -2.0, 2.0, (visual_feature_dim, num_classes),
            jnp.float32) * 0.01,
        "b_fc": jnp.zeros((1, num_classes), jnp.float32),
    }
    return params


def _reference_forward(img_1, img_2, params):
    """Plain-JAX reference of the same forward pass (for a correctness check)."""
    x1 = jnp.transpose(img_1, (0, 2, 3, 1)).astype(jnp.float32)
    x2 = jnp.transpose(img_2, (0, 2, 3, 1)).astype(jnp.float32)
    x = jnp.concatenate([x1, x2], axis=-1)
    patches = _extract_patches_nhwc(x).astype(jnp.bfloat16)
    w_conv = params["w_conv"].astype(jnp.bfloat16)
    conv = jnp.einsum("bpk,kc->bpc", patches, w_conv,
                      preferred_element_type=jnp.float32) + params["b_conv"]
    conv = jnp.maximum(conv, 0.0)
    gap = jnp.mean(conv, axis=1)
    feat = jnp.maximum(gap @ params["w_proj"] + params["b_proj"], 0.0)
    return feat @ params["w_fc"] + params["b_fc"]


if __name__ == "__main__":
    key = jax.random.PRNGKey(0)
    k_img1, k_img2, k_params = jax.random.split(key, 3)

    B, C, H, W = 2, 4, 16, 16
    img_1 = jax.random.normal(k_img1, (B, C, H, W), jnp.float32)  # NCHW
    img_2 = jax.random.normal(k_img2, (B, C, H, W), jnp.float32)  # NCHW

    params = make_params(k_params, cin_per_img=C, cmid=16,
                         visual_feature_dim=32, num_classes=8)

    preds = vision_sfm_forward(img_1, img_2, params)
    preds = jax.block_until_ready(preds)

    ref = _reference_forward(img_1, img_2, params)
    assert preds.shape == (B, 8), preds.shape
    assert jnp.allclose(preds, ref, atol=1e-3, rtol=1e-3), (
        "Pallas output mismatch vs. reference")

    print("KERNEL_OK")
</pallas_src>

<mosaic_0001>
module attributes {stable_mosaic.version = 11 : i64} {
  func.func @_sfm_kernel(%arg0: i32, %arg1: memref<2x256x72xbf16, #tpu.memory_space<vmem>>, %arg2: memref<72x16xbf16, #tpu.memory_space<vmem>>, %arg3: memref<1x16xf32, #tpu.memory_space<vmem>>, %arg4: memref<16x32xf32, #tpu.memory_space<vmem>>, %arg5: memref<1x32xf32, #tpu.memory_space<vmem>>, %arg6: memref<32x8xf32, #tpu.memory_space<vmem>>, %arg7: memref<1x8xf32, #tpu.memory_space<vmem>>, %arg8: memref<2x8xf32, #tpu.memory_space<vmem>>) attributes {dimension_semantics = [#tpu.dimension_semantics<parallel>], iteration_bounds = array<i64: 1>, scalar_prefetch = 0 : i64, scratch_operands = 0 : i64, tpu.core_type = #tpu.core_type<tc>, window_params = [{transform_indices = @transform_0, window_bounds = array<i64: 2, 256, 72>}, {pipeline_mode = #tpu.pipeline_mode<synchronous>, transform_indices = @transform_1, window_bounds = array<i64: 72, 16>}, {pipeline_mode = #tpu.pipeline_mode<synchronous>, transform_indices = @transform_2, window_bounds = array<i64: 1, 16>}, {pipeline_mode = #tpu.pipeline_mode<synchronous>, transform_indices = @transform_3, window_bounds = array<i64: 16, 32>}, {pipeline_mode = #tpu.pipeline_mode<synchronous>, transform_indices = @transform_4, window_bounds = array<i64: 1, 32>}, {pipeline_mode = #tpu.pipeline_mode<synchronous>, transform_indices = @transform_5, window_bounds = array<i64: 32, 8>}, {pipeline_mode = #tpu.pipeline_mode<synchronous>, transform_indices = @transform_6, window_bounds = array<i64: 1, 8>}, {transform_indices = @transform_7, window_bounds = array<i64: 2, 8>}]} {
    %c0 = arith.constant 0 : index
    %c0_0 = arith.constant 0 : index
    %c0_1 = arith.constant 0 : index
    %0 = vector.load %arg1[%c0, %c0_0, %c0_1] : memref<2x256x72xbf16, #tpu.memory_space<vmem>>, vector<2x256x72xbf16>
    %1 = vector.shape_cast %0 : vector<2x256x72xbf16> to vector<512x72xbf16>
    %c0_2 = arith.constant 0 : index
    %c0_3 = arith.constant 0 : index
    %2 = vector.load %arg2[%c0_2, %c0_3] : memref<72x16xbf16, #tpu.memory_space<vmem>>, vector<72x16xbf16>
    %cst = arith.constant dense<0.000000e+00> : vector<512x16xf32>
    %3 = tpu.matmul %1, %2, %cst {dimension_numbers = #tpu.dot_dimension_numbers<[1], [0], [0], [1], [0, 0, 1, 1], [], []>} : vector<512x72xbf16>, vector<72x16xbf16>, vector<512x16xf32> -> vector<512x16xf32>
    %c0_4 = arith.constant 0 : index
    %c0_5 = arith.constant 0 : index
    %4 = vector.load %arg3[%c0_4, %c0_5] : memref<1x16xf32, #tpu.memory_space<vmem>>, vector<1x16xf32>
    %5 = vector.broadcast %4 : vector<1x16xf32> to vector<512x16xf32>
    %6 = arith.addf %3, %5 : vector<512x16xf32>
    %cst_6 = arith.constant 0.000000e+00 : f32
    %7 = vector.broadcast %cst_6 : f32 to vector<512x16xf32>
    %8 = arith.maximumf %6, %7 : vector<512x16xf32>
    %9 = vector.shape_cast %8 : vector<512x16xf32> to vector<2x256x16xf32>
    %cst_7 = arith.constant dense<0.000000e+00> : vector<2x16xf32>
    %10 = vector.multi_reduction <add>, %9, %cst_7 [1] : vector<2x256x16xf32> to vector<2x16xf32>
    %c0_8 = arith.constant 0 : index
    %c0_9 = arith.constant 0 : index
    %11 = vector.load %arg4[%c0_8, %c0_9] : memref<16x32xf32, #tpu.memory_space<vmem>>, vector<16x32xf32>
    %cst_10 = arith.constant dense<0.000000e+00> : vector<2x32xf32>
    %12 = tpu.matmul %10, %11, %cst_10 {dimension_numbers = #tpu.dot_dimension_numbers<[1], [0], [0], [1], [0, 0, 1, 1], [], []>} : vector<2x16xf32>, vector<16x32xf32>, vector<2x32xf32> -> vector<2x32xf32>
    %c0_11 = arith.constant 0 : index
    %c0_12 = arith.constant 0 : index
    %13 = vector.load %arg5[%c0_11, %c0_12] : memref<1x32xf32, #tpu.memory_space<vmem>>, vector<1x32xf32>
    %14 = vector.broadcast %13 : vector<1x32xf32> to vector<2x32xf32>
    %15 = arith.addf %12, %14 : vector<2x32xf32>
    %cst_13 = arith.constant 0.000000e+00 : f32
    %16 = vector.broadcast %cst_13 : f32 to vector<2x32xf32>
    %17 = arith.maximumf %15, %16 : vector<2x32xf32>
    %c0_14 = arith.constant 0 : index
    %c0_15 = arith.constant 0 : index
    %18 = vector.load %arg6[%c0_14, %c0_15] : memref<32x8xf32, #tpu.memory_space<vmem>>, vector<32x8xf32>
    %cst_16 = arith.constant dense<0.000000e+00> : vector<2x8xf32>
    %19 = tpu.matmul %17, %18, %cst_16 {dimension_numbers = #tpu.dot_dimension_numbers<[1], [0], [0], [1], [0, 0, 1, 1], [], []>} : vector<2x32xf32>, vector<32x8xf32>, vector<2x8xf32> -> vector<2x8xf32>
    %c0_17 = arith.constant 0 : index
    %c0_18 = arith.constant 0 : index
    %20 = vector.load %arg7[%c0_17, %c0_18] : memref<1x8xf32, #tpu.memory_space<vmem>>, vector<1x8xf32>
    %21 = vector.broadcast %20 : vector<1x8xf32> to vector<2x8xf32>
    %22 = arith.addf %19, %21 : vector<2x8xf32>
    %c0_19 = arith.constant 0 : index
    %c0_20 = arith.constant 0 : index
    %23 = vector.load %arg8[%c0_19, %c0_20] : memref<2x8xf32, #tpu.memory_space<vmem>>, vector<2x8xf32>
    tpu.vector_store %arg8[%c0_19, %c0_20], %22 {strides = array<i32>} : memref<2x8xf32, #tpu.memory_space<vmem>>, vector<2x8xf32>,
    return
  }
  func.func @transform_0(%arg0: i32) -> (i32, i32, i32) {
    %c0_i32 = arith.constant 0 : i32
    %c0_i32_0 = arith.constant 0 : i32
    %c0_i32_1 = arith.constant 0 : i32
    return %arg0, %c0_i32, %c0_i32_0 : i32, i32, i32
  }
  func.func @transform_1(%arg0: i32) -> (i32, i32) {
    %c0_i32 = arith.constant 0 : i32
    %c0_i32_0 = arith.constant 0 : i32
    %c0_i32_1 = arith.constant 0 : i32
    return %c0_i32, %c0_i32_0 : i32, i32
  }
  func.func @transform_2(%arg0: i32) -> (i32, i32) {
    %c0_i32 = arith.constant 0 : i32
    %c0_i32_0 = arith.constant 0 : i32
    %c0_i32_1 = arith.constant 0 : i32
    return %c0_i32, %c0_i32_0 : i32, i32
  }
  func.func @transform_3(%arg0: i32) -> (i32, i32) {
    %c0_i32 = arith.constant 0 : i32
    %c0_i32_0 = arith.constant 0 : i32
    %c0_i32_1 = arith.constant 0 : i32
    return %c0_i32, %c0_i32_0 : i32, i32
  }
  func.func @transform_4(%arg0: i32) -> (i32, i32) {
    %c0_i32 = arith.constant 0 : i32
    %c0_i32_0 = arith.constant 0 : i32
    %c0_i32_1 = arith.constant 0 : i32
    return %c0_i32, %c0_i32_0 : i32, i32
  }
  func.func @transform_5(%arg0: i32) -> (i32, i32) {
    %c0_i32 = arith.constant 0 : i32
    %c0_i32_0 = arith.constant 0 : i32
    %c0_i32_1 = arith.constant 0 : i32
    return %c0_i32, %c0_i32_0 : i32, i32
  }
  func.func @transform_6(%arg0: i32) -> (i32, i32) {
    %c0_i32 = arith.constant 0 : i32
    %c0_i32_0 = arith.constant 0 : i32
    %c0_i32_1 = arith.constant 0 : i32
    return %c0_i32, %c0_i32_0 : i32, i32
  }
  func.func @transform_7(%arg0: i32) -> (i32, i32) {
    %c0_i32 = arith.constant 0 : i32
    %c0_i32_0 = arith.constant 0 : i32
    return %arg0, %c0_i32 : i32, i32
  }
}

</mosaic_0001>

<llo_original>
// kernel: tpu_custom_call.1
$region0: #{tpu_custom_call.1}
  #allocation0 [shape = 'u32[]', space=smem, size = 0x4, offset = 0x4, fixed_abs, tag = 'smem constant byte address 0x4 - core index']
  #allocation1 [shape = 'u32[72,128]{1,0:T(1,128)}', space=vmem, size = 0x9000, scoped, tag = 'internal scratch']
  %s0 = inlined_call_operand.vmem [shape: bf16[2,256,72], index: 0, kind: input, shape index: {}]
  %s1 = inlined_call_operand.vmem [shape: bf16[72,16], index: 1, kind: input, shape index: {}]
  %s2 = inlined_call_operand.vmem [shape: f32[1,16], index: 2, kind: input, shape index: {}]
  %s3 = inlined_call_operand.vmem [shape: f32[16,32], index: 3, kind: input, shape index: {}]
  %s4 = inlined_call_operand.vmem [shape: f32[1,32], index: 4, kind: input, shape index: {}]
  %s5 = inlined_call_operand.vmem [shape: f32[32,8], index: 5, kind: input, shape index: {}]
  %s6 = inlined_call_operand.vmem [shape: f32[1,8], index: 6, kind: input, shape index: {}]
  %s7 = inlined_call_operand.hbm [shape: f32[2,8], index: 7, kind: output, shape index: {}]
  %s8 = sld [smem:[#allocation0]]
  $region38: #{tpu_custom_call.1} parent=0
    _
  %s10 = ssub.s32 1, %s8
  %s11 = scalar_select 0, %s10, %s8
  $region1: #{tpu_custom_call.1} parent=0
    #allocation2 [shape = 'u8[1024]{0}', space=vmem, size = 0x400, scoped, tag = 'output window, operand 0, single buffered']
    #allocation3 [shape = 's32[1]{0}', space=sflag, size = 0x4, scoped, tag = 'scoped memory for tpu_custom_call.1']
    %12 = vsyncpa [#allocation3], 0
    // Predicated region
    $region2: #{tpu_custom_call.1} parent=1 // pred_check
      _
    $region3: #{tpu_custom_call.1} parent=1 // pred_check_branch
      %14 = sbr.rel (0) target = $region5
    $region4: #{tpu_custom_call.1} parent=1 // pred_region
      _
    $region5: #{tpu_custom_call.1} parent=1 // pred_fallthru
      _
    // Predicated region
    $region6: #{tpu_custom_call.1} parent=1 // pred_check
      _
    $region7: #{tpu_custom_call.1} parent=1 // pred_check_branch
      %16 = sbr.rel (0) target = $region9
    $region8: #{tpu_custom_call.1} parent=1 // pred_region
      _
    $region9: #{tpu_custom_call.1} parent=1 // pred_fallthru
      _
    // Predicated region
    $region10: #{tpu_custom_call.1} parent=1 // pred_check
      _
    $region11: #{tpu_custom_call.1} parent=1 // pred_check_branch
      %18 = sbr.rel (0) target = $region13
    $region12: #{tpu_custom_call.1} parent=1 // pred_region
      _
    $region13: #{tpu_custom_call.1} parent=1 // pred_fallthru
      _
    // Predicated region
    $region14: #{tpu_custom_call.1} parent=1 // pred_check
      _
    $region15: #{tpu_custom_call.1} parent=1 // pred_check_branch
      %20 = sbr.rel (0) target = $region17
    $region16: #{tpu_custom_call.1} parent=1 // pred_region
      _
    $region17: #{tpu_custom_call.1} parent=1 // pred_fallthru
      _
    // Predicated region
    $region18: #{tpu_custom_call.1} parent=1 // pred_check
      _
    $region19: #{tpu_custom_call.1} parent=1 // pred_check_branch
      %22 = sbr.rel (0) target = $region21
    $region20: #{tpu_custom_call.1} parent=1 // pred_region
      _
    $region21: #{tpu_custom_call.1} parent=1 // pred_fallthru
      _
    // Predicated region
    $region22: #{tpu_custom_call.1} parent=1 // pred_check
      _
    $region23: #{tpu_custom_call.1} parent=1 // pred_check_branch
      %24 = sbr.rel (0) target = $region25
    $region24: #{tpu_custom_call.1} parent=1 // pred_region
      _
    $region25: #{tpu_custom_call.1} parent=1 // pred_fallthru
      _
    // Predicated region
    $region26: #{tpu_custom_call.1} parent=1 // pred_check
      _
    $region27: #{tpu_custom_call.1} parent=1 // pred_check_branch
      %26 = sbr.rel (0) target = $region29
    $region28: #{tpu_custom_call.1} parent=1 // pred_region
      _
    $region29: #{tpu_custom_call.1} parent=1 // pred_fallthru
      _
    %v28 = vld [vmem:[%s0] sm:$0xf]
    %v29 = vld [vmem:[%s0 + $0x4] sm:$0xf]
    %v30 = vld [vmem:[%s0 + $0x8] sm:$0xf]
    %v31 = vld [vmem:[%s0 + $0xc] sm:$0xf]
    %v32 = vld [vmem:[%s0 + $0x10] sm:$0xf]
    %v33 = vld [vmem:[%s0 + $0x14] sm:$0xf]
    %v34 = vld [vmem:[%s0 + $0x18] sm:$0xf]
    %v35 = vld [vmem:[%s0 + $0x1c] sm:$0xf]
    %v36 = vld [vmem:[%s0 + $0x20] sm:$0xf]
    %v37 = vld [vmem:[%s0 + $0x24] sm:$0xf]
    %v38 = vld [vmem:[%s0 + $0x28] sm:$0xf]
    %v39 = vld [vmem:[%s0 + $0x2c] sm:$0xf]
    %v40 = vld [vmem:[%s0 + $0x30] sm:$0xf]
    %v41 = vld [vmem:[%s0 + $0x34] sm:$0xf]
    %v42 = vld [vmem:[%s0 + $0x38] sm:$0xf]
    %v43 = vld [vmem:[%s0 + $0x3c] sm:$0xf]
    %v44 = vld [vmem:[%s0 + $0x40] sm:$0xf]
    %v45 = vld [vmem:[%s0 + $0x44] sm:$0xf]
    %v46 = vld [vmem:[%s0 + $0x48] sm:$0xf]
    %v47 = vld [vmem:[%s0 + $0x4c] sm:$0xf]
    %v48 = vld [vmem:[%s0 + $0x50] sm:$0xf]
    %v49 = vld [vmem:[%s0 + $0x54] sm:$0xf]
    %v50 = vld [vmem:[%s0 + $0x58] sm:$0xf]
    %v51 = vld [vmem:[%s0 + $0x5c] sm:$0xf]
    %v52 = vld [vmem:[%s0 + $0x60] sm:$0xf]
    %v53 = vld [vmem:[%s0 + $0x64] sm:$0xf]
    %v54 = vld [vmem:[%s0 + $0x68] sm:$0xf]
    %v55 = vld [vmem:[%s0 + $0x6c] sm:$0xf]
    %v56 = vld [vmem:[%s0 + $0x70] sm:$0xf]
    %v57 = vld [vmem:[%s0 + $0x74] sm:$0xf]
    %v58 = vld [vmem:[%s0 + $0x78] sm:$0xf]
    %v59 = vld [vmem:[%s0 + $0x7c] sm:$0xf]
    %v60 = vld [vmem:[%s0 + $0x80] sm:$0xf]
    %v61 = vld [vmem:[%s0 + $0x84] sm:$0xf]
    %v62 = vld [vmem:[%s0 + $0x88] sm:$0xf]
    %v63 = vld [vmem:[%s0 + $0x8c] sm:$0xf]
    %v64 = vld [vmem:[%s0 + $0x90] sm:$0xf]
    %v65 = vld [vmem:[%s0 + $0x94] sm:$0xf]
    %v66 = vld [vmem:[%s0 + $0x98] sm:$0xf]
    %v67 = vld [vmem:[%s0 + $0x9c] sm:$0xf]
    %v68 = vld [vmem:[%s0 + $0xa0] sm:$0xf]
    %v69 = vld [vmem:[%s0 + $0xa4] sm:$0xf]
    %v70 = vld [vmem:[%s0 + $0xa8] sm:$0xf]
    %v71 = vld [vmem:[%s0 + $0xac] sm:$0xf]
    %v72 = vld [vmem:[%s0 + $0xb0] sm:$0xf]
    %v73 = vld [vmem:[%s0 + $0xb4] sm:$0xf]
    %v74 = vld [vmem:[%s0 + $0xb8] sm:$0xf]
    %v75 = vld [vmem:[%s0 + $0xbc] sm:$0xf]
    %v76 = vld [vmem:[%s0 + $0xc0] sm:$0xf]
    %v77 = vld [vmem:[%s0 + $0xc4] sm:$0xf]
    %v78 = vld [vmem:[%s0 + $0xc8] sm:$0xf]
    %v79 = vld [vmem:[%s0 + $0xcc] sm:$0xf]
    %v80 = vld [vmem:[%s0 + $0xd0] sm:$0xf]
    %v81 = vld [vmem:[%s0 + $0xd4] sm:$0xf]
    %v82 = vld [vmem:[%s0 + $0xd8] sm:$0xf]
    %v83 = vld [vmem:[%s0 + $0xdc] sm:$0xf]
    %v84 = vld [vmem:[%s0 + $0xe0] sm:$0xf]
    %v85 = vld [vmem:[%s0 + $0xe4] sm:$0xf]
    %v86 = vld [vmem:[%s0 + $0xe8] sm:$0xf]
    %v87 = vld [vmem:[%s0 + $0xec] sm:$0xf]
    %v88 = vld [vmem:[%s0 + $0xf0] sm:$0xf]
    %v89 = vld [vmem:[%s0 + $0xf4] sm:$0xf]
    %v90 = vld [vmem:[%s0 + $0xf8] sm:$0xf]
    %v91 = vld [vmem:[%s0 + $0xfc] sm:$0xf]
    %v92 = vld [vmem:[%s1] sm:$0xf]
    %v93 = vld [vmem:[%s1 + $0x4] sm:$0xf]
    %v94 = vld [vmem:[%s1 + $0x8] sm:$0xf]
    %v95 = vld [vmem:[%s1 + $0xc] sm:$0xf]
    %v96 = vld [vmem:[%s1 + $0x10] sm:$0xf]
    %v97 = vld [vmem:[%s1 + $0x14] sm:$0xf]
    %v98 = vld [vmem:[%s1 + $0x18] sm:$0xf]
    %v99 = vld [vmem:[%s1 + $0x1c] sm:$0xf]
    %v100 = vld [vmem:[%s1 + $0x20] sm:$0xf]
    %v101 = vld [vmem:[%s2] sm:$0x1]
    %v103 = vperm.slane %v101, 0
    %v169 = vunpack.c.l.b16 %v28
    %v170 = vunpack.c.l.b16 %v29
    %v171 = vunpack.c.l.b16 %v30
    %v172 = vunpack.c.l.b16 %v31
    %v173 = vunpack.c.l.b16 %v32
    %v174 = vunpack.c.l.b16 %v33
    %v175 = vunpack.c.l.b16 %v34
    %v176 = vunpack.c.l.b16 %v35
    %v177 = vunpack.c.l.b16 %v36
    %v178 = vunpack.c.l.b16 %v37
    %v179 = vunpack.c.l.b16 %v38
    %v180 = vunpack.c.l.b16 %v39
    %v181 = vunpack.c.l.b16 %v40
    %v182 = vunpack.c.l.b16 %v41
    %v183 = vunpack.c.l.b16 %v42
    %v184 = vunpack.c.l.b16 %v43
    %v185 = vunpack.c.l.b16 %v44
    %v186 = vunpack.c.l.b16 %v45
    %v187 = vunpack.c.l.b16 %v46
    %v188 = vunpack.c.l.b16 %v47
    %v189 = vunpack.c.l.b16 %v48
    %v190 = vunpack.c.l.b16 %v49
    %v191 = vunpack.c.l.b16 %v50
    %v192 = vunpack.c.l.b16 %v51
    %v193 = vunpack.c.l.b16 %v52
    %v194 = vunpack.c.l.b16 %v53
    %v195 = vunpack.c.l.b16 %v54
    %v196 = vunpack.c.l.b16 %v55
    %v197 = vunpack.c.l.b16 %v56
    %v198 = vunpack.c.l.b16 %v57
    %v199 = vunpack.c.l.b16 %v58
    %v200 = vunpack.c.l.b16 %v59
    %v201 = vunpack.c.l.b16 %v60
    %v202 = vunpack.c.l.b16 %v61
    %v203 = vunpack.c.l.b16 %v62
    %v204 = vunpack.c.l.b16 %v63
    %v205 = vunpack.c.l.b16 %v64
    %v206 = vunpack.c.l.b16 %v65
    %v207 = vunpack.c.l.b16 %v66
    %v208 = vunpack.c.l.b16 %v67
    %v209 = vunpack.c.l.b16 %v68
    %v210 = vunpack.c.l.b16 %v69
    %v211 = vunpack.c.l.b16 %v70
    %v212 = vunpack.c.l.b16 %v71
    %v213 = vunpack.c.l.b16 %v72
    %v214 = vunpack.c.l.b16 %v73
    %v215 = vunpack.c.l.b16 %v74
    %v216 = vunpack.c.l.b16 %v75
    %v217 = vunpack.c.l.b16 %v76
    %v218 = vunpack.c.l.b16 %v77
    %v219 = vunpack.c.l.b16 %v78
    %v220 = vunpack.c.l.b16 %v79
    %v221 = vunpack.c.l.b16 %v80
    %v222 = vunpack.c.l.b16 %v81
    %v223 = vunpack.c.l.b16 %v82
    %v224 = vunpack.c.l.b16 %v83
    %v225 = vunpack.c.l.b16 %v84
    %v226 = vunpack.c.l.b16 %v85
    %v227 = vunpack.c.l.b16 %v86
    %v228 = vunpack.c.l.b16 %v87
    %v229 = vunpack.c.l.b16 %v88
    %v230 = vunpack.c.l.b16 %v89
    %v231 = vunpack.c.l.b16 %v90
    %v232 = vunpack.c.l.b16 %v91
    %v233 = vpack.c.b16 %v170, %v169
    %v234 = vpack.c.b16 %v172, %v171
    %v235 = vpack.c.b16 %v174, %v173
    %v236 = vpack.c.b16 %v176, %v175
    %v237 = vpack.c.b16 %v178, %v177
    %v238 = vpack.c.b16 %v180, %v179
    %v239 = vpack.c.b16 %v182, %v181
    %v240 = vpack.c.b16 %v184, %v183
    %v241 = vpack.c.b16 %v186, %v185
    %v242 = vpack.c.b16 %v188, %v187
    %v243 = vpack.c.b16 %v190, %v189
    %v244 = vpack.c.b16 %v192, %v191
    %v245 = vpack.c.b16 %v194, %v193
    %v246 = vpack.c.b16 %v196, %v195
    %v247 = vpack.c.b16 %v198, %v197
    %v248 = vpack.c.b16 %v200, %v199
    %v249 = vpack.c.b16 %v202, %v201
    %v250 = vpack.c.b16 %v204, %v203
    %v251 = vpack.c.b16 %v206, %v205
    %v252 = vpack.c.b16 %v208, %v207
    %v253 = vpack.c.b16 %v210, %v209
    %v254 = vpack.c.b16 %v212, %v211
    %v255 = vpack.c.b16 %v214, %v213
    %v256 = vpack.c.b16 %v216, %v215
    %v257 = vpack.c.b16 %v218, %v217
    %v258 = vpack.c.b16 %v220, %v219
    %v259 = vpack.c.b16 %v222, %v221
    %v260 = vpack.c.b16 %v224, %v223
    %v261 = vpack.c.b16 %v226, %v225
    %v262 = vpack.c.b16 %v228, %v227
    %v263 = vpack.c.b16 %v230, %v229
    %v264 = vpack.c.b16 %v232, %v231
    %v274 = vunpack.c.l.b16 %v92
    %v275 = vunpack.c.l.b16 %v93
    %v276 = vunpack.c.l.b16 %v94
    %v277 = vunpack.c.l.b16 %v95
    %v278 = vunpack.c.l.b16 %v96
    %v279 = vunpack.c.l.b16 %v97
    %v280 = vunpack.c.l.b16 %v98
    %v281 = vunpack.c.l.b16 %v99
    %v282 = vunpack.c.l.b16 %v100
    %v283 = vpack.c.b16 %v275, %v274
    %v284 = vpack.c.b16 %v277, %v276
    %v285 = vpack.c.b16 %v279, %v278
    %v286 = vpack.c.b16 %v281, %v280
    %v287 = vpack.c.b16 %v282, %v282
    %vm292 = vcmask 588800
    %v294 = vsel %vm292, %v233, 0
    %v297 = vsel %vm292, %v234, 0
    %v300 = vsel %vm292, %v235, 0
    %v303 = vsel %vm292, %v236, 0
    %v306 = vsel %vm292, %v237, 0
    %v309 = vsel %vm292, %v238, 0
    %v312 = vsel %vm292, %v239, 0
    %v315 = vsel %vm292, %v240, 0
    %v318 = vsel %vm292, %v241, 0
    %v321 = vsel %vm292, %v242, 0
    %v324 = vsel %vm292, %v243, 0
    %v327 = vsel %vm292, %v244, 0
    %v330 = vsel %vm292, %v245, 0
    %v333 = vsel %vm292, %v246, 0
    %v336 = vsel %vm292, %v247, 0
    %v339 = vsel %vm292, %v248, 0
    %v342 = vsel %vm292, %v249, 0
    %v345 = vsel %vm292, %v250, 0
    %v348 = vsel %vm292, %v251, 0
    %v351 = vsel %vm292, %v252, 0
    %v354 = vsel %vm292, %v253, 0
    %v357 = vsel %vm292, %v254, 0
    %v360 = vsel %vm292, %v255, 0
    %v363 = vsel %vm292, %v256, 0
    %v366 = vsel %vm292, %v257, 0
    %v369 = vsel %vm292, %v258, 0
    %v372 = vsel %vm292, %v259, 0
    %v375 = vsel %vm292, %v260, 0
    %v378 = vsel %vm292, %v261, 0
    %v381 = vsel %vm292, %v262, 0
    %v384 = vsel %vm292, %v263, 0
    %v387 = vsel %vm292, %v264, 0
    %vm389 = vcmask 1043456
    %v391 = vsel %vm389, %v287, 0
    %393 = vmatpush.bf16.msra.mxu0 0
    %394 = vmatpush.bf16.msra.mxu0 0
    %395 = vmatpush.bf16.msra.mxu0 0
    %396 = vmatpush.bf16.msra.mxu0 %v391
    %397 = vmatpush.bf16.msra.mxu0 %v286
    %398 = vmatpush.bf16.msra.mxu0 %v285
    %399 = vmatpush.bf16.msra.mxu0 %v284
    %400 = vmatpush.bf16.msra.mxu0 %v283
    %401 = vmatmul.bf16.gmra.mxu0 %v294
    %v402 = vpop.f32.mrf.mxu0
    %v403 = vadd.f32 %v103, %v402
    %v404 = vpop.f32.mrf.mxu0
    %v405 = vadd.f32 %v103, %v404
    %406 = vmatmul.bf16.gmra.mxu0 %v297
    %v407 = vpop.f32.mrf.mxu0
    %v408 = vadd.f32 %v103, %v407
    %v409 = vpop.f32.mrf.mxu0
    %v410 = vadd.f32 %v103, %v409
    %411 = vmatmul.bf16.gmra.mxu0 %v300
    %v412 = vpop.f32.mrf.mxu0
    %v413 = vadd.f32 %v103, %v412
    %v414 = vpop.f32.mrf.mxu0
    %v415 = vadd.f32 %v103, %v414
    %416 = vmatmul.bf16.gmra.mxu0 %v303
    %v417 = vpop.f32.mrf.mxu0
    %v418 = vadd.f32 %v103, %v417
    %v419 = vpop.f32.mrf.mxu0
    %v420 = vadd.f32 %v103, %v419
    %421 = vmatmul.bf16.gmra.mxu0 %v306
    %v422 = vpop.f32.mrf.mxu0
    %v423 = vadd.f32 %v103, %v422
    %v424 = vpop.f32.mrf.mxu0
    %v425 = vadd.f32 %v103, %v424
    %426 = vmatmul.bf16.gmra.mxu0 %v309
    %v427 = vpop.f32.mrf.mxu0
    %v428 = vadd.f32 %v103, %v427
    %v429 = vpop.f32.mrf.mxu0
    %v430 = vadd.f32 %v103, %v429
    %431 = vmatmul.bf16.gmra.mxu0 %v312
    %v432 = vpop.f32.mrf.mxu0
    %v433 = vadd.f32 %v103, %v432
    %v434 = vpop.f32.mrf.mxu0
    %v435 = vadd.f32 %v103, %v434
    %436 = vmatmul.bf16.gmra.mxu0 %v315
    %v437 = vpop.f32.mrf.mxu0
    %v438 = vadd.f32 %v103, %v437
    %v439 = vpop.f32.mrf.mxu0
    %v440 = vadd.f32 %v103, %v439
    %441 = vmatmul.bf16.gmra.mxu0 %v318
    %v442 = vpop.f32.mrf.mxu0
    %v443 = vadd.f32 %v103, %v442
    %v444 = vpop.f32.mrf.mxu0
    %v445 = vadd.f32 %v103, %v444
    %446 = vmatmul.bf16.gmra.mxu0 %v321
    %v447 = vpop.f32.mrf.mxu0
    %v448 = vadd.f32 %v103, %v447
    %v449 = vpop.f32.mrf.mxu0
    %v450 = vadd.f32 %v103, %v449
    %451 = vmatmul.bf16.gmra.mxu0 %v324
    %v452 = vpop.f32.mrf.mxu0
    %v453 = vadd.f32 %v103, %v452
    %v454 = vpop.f32.mrf.mxu0
    %v455 = vadd.f32 %v103, %v454
    %456 = vmatmul.bf16.gmra.mxu0 %v327
    %v457 = vpop.f32.mrf.mxu0
    %v458 = vadd.f32 %v103, %v457
    %v459 = vpop.f32.mrf.mxu0
    %v460 = vadd.f32 %v103, %v459
    %461 = vmatmul.bf16.gmra.mxu0 %v330
    %v462 = vpop.f32.mrf.mxu0
    %v463 = vadd.f32 %v103, %v462
    %v464 = vpop.f32.mrf.mxu0
    %v465 = vadd.f32 %v103, %v464
    %466 = vmatmul.bf16.gmra.mxu0 %v333
    %v467 = vpop.f32.mrf.mxu0
    %v468 = vadd.f32 %v103, %v467
    %v469 = vpop.f32.mrf.mxu0
    %v470 = vadd.f32 %v103, %v469
    %471 = vmatmul.bf16.gmra.mxu0 %v336
    %v472 = vpop.f32.mrf.mxu0
    %v473 = vadd.f32 %v103, %v472
    %v474 = vpop.f32.mrf.mxu0
    %v475 = vadd.f32 %v103, %v474
    %476 = vmatmul.bf16.gmra.mxu0 %v339
    %v477 = vpop.f32.mrf.mxu0
    %v478 = vadd.f32 %v103, %v477
    %v479 = vpop.f32.mrf.mxu0
    %v480 = vadd.f32 %v103, %v479
    %481 = vmatmul.bf16.gmra.mxu0 %v342
    %v482 = vpop.f32.mrf.mxu0
    %v483 = vadd.f32 %v103, %v482
    %v484 = vpop.f32.mrf.mxu0
    %v485 = vadd.f32 %v103, %v484
    %486 = vmatmul.bf16.gmra.mxu0 %v345
    %v487 = vpop.f32.mrf.mxu0
    %v488 = vadd.f32 %v103, %v487
    %v489 = vpop.f32.mrf.mxu0
    %v490 = vadd.f32 %v103, %v489
    %491 = vmatmul.bf16.gmra.mxu0 %v348
    %v492 = vpop.f32.mrf.mxu0
    %v493 = vadd.f32 %v103, %v492
    %v494 = vpop.f32.mrf.mxu0
    %v495 = vadd.f32 %v103, %v494
    %496 = vmatmul.bf16.gmra.mxu0 %v351
    %v497 = vpop.f32.mrf.mxu0
    %v498 = vadd.f32 %v103, %v497
    %v499 = vpop.f32.mrf.mxu0
    %v500 = vadd.f32 %v103, %v499
    %501 = vmatmul.bf16.gmra.mxu0 %v354
    %v502 = vpop.f32.mrf.mxu0
    %v503 = vadd.f32 %v103, %v502
    %v504 = vpop.f32.mrf.mxu0
    %v505 = vadd.f32 %v103, %v504
    %506 = vmatmul.bf16.gmra.mxu0 %v357
    %v507 = vpop.f32.mrf.mxu0
    %v508 = vadd.f32 %v103, %v507
    %v509 = vpop.f32.mrf.mxu0
    %v510 = vadd.f32 %v103, %v509
    %511 = vmatmul.bf16.gmra.mxu0 %v360
    %v512 = vpop.f32.mrf.mxu0
    %v513 = vadd.f32 %v103, %v512
    %v514 = vpop.f32.mrf.mxu0
    %v515 = vadd.f32 %v103, %v514
    %516 = vmatmul.bf16.gmra.mxu0 %v363
    %v517 = vpop.f32.mrf.mxu0
    %v518 = vadd.f32 %v103, %v517
    %v519 = vpop.f32.mrf.mxu0
    %v520 = vadd.f32 %v103, %v519
    %521 = vmatmul.bf16.gmra.mxu0 %v366
    %v522 = vpop.f32.mrf.mxu0
    %v523 = vadd.f32 %v103, %v522
    %v524 = vpop.f32.mrf.mxu0
    %v525 = vadd.f32 %v103, %v524
    %526 = vmatmul.bf16.gmra.mxu0 %v369
    %v527 = vpop.f32.mrf.mxu0
    %v528 = vadd.f32 %v103, %v527
    %v529 = vpop.f32.mrf.mxu0
    %v530 = vadd.f32 %v103, %v529
    %531 = vmatmul.bf16.gmra.mxu0 %v372
    %v532 = vpop.f32.mrf.mxu0
    %v533 = vadd.f32 %v103, %v532
    %v534 = vpop.f32.mrf.mxu0
    %v535 = vadd.f32 %v103, %v534
    %536 = vmatmul.bf16.gmra.mxu0 %v375
    %v537 = vpop.f32.mrf.mxu0
    %v538 = vadd.f32 %v103, %v537
    %v539 = vpop.f32.mrf.mxu0
    %v540 = vadd.f32 %v103, %v539
    %541 = vmatmul.bf16.gmra.mxu0 %v378
    %v542 = vpop.f32.mrf.mxu0
    %v543 = vadd.f32 %v103, %v542
    %v544 = vpop.f32.mrf.mxu0
    %v545 = vadd.f32 %v103, %v544
    %546 = vmatmul.bf16.gmra.mxu0 %v381
    %v547 = vpop.f32.mrf.mxu0
    %v548 = vadd.f32 %v103, %v547
    %v549 = vpop.f32.mrf.mxu0
    %v550 = vadd.f32 %v103, %v549
    %551 = vmatmul.bf16.gmra.mxu0 %v384
    %v552 = vpop.f32.mrf.mxu0
    %v553 = vadd.f32 %v103, %v552
    %v554 = vpop.f32.mrf.mxu0
    %v555 = vadd.f32 %v103, %v554
    %556 = vmatmul.bf16.gmra.mxu0 %v387
    %v557 = vpop.f32.mrf.mxu0
    %v558 = vadd.f32 %v103, %v557
    %v559 = vpop.f32.mrf.mxu0
    %v560 = vadd.f32 %v103, %v559
    %561 = vdwg.mxu0
    %v562 = vmax.f32 %v403, 0.0
    %v563 = vmax.f32 %v405, 0.0
    %v564 = vmax.f32 %v408, 0.0
    %v565 = vmax.f32 %v410, 0.0
    %v566 = vmax.f32 %v413, 0.0
    %v567 = vmax.f32 %v415, 0.0
    %v568 = vmax.f32 %v418, 0.0
    %v569 = vmax.f32 %v420, 0.0
    %v570 = vmax.f32 %v423, 0.0
    %v571 = vmax.f32 %v425, 0.0
    %v572 = vmax.f32 %v428, 0.0
    %v573 = vmax.f32 %v430, 0.0
    %v574 = vmax.f32 %v433, 0.0
    %v575 = vmax.f32 %v435, 0.0
    %v576 = vmax.f32 %v438, 0.0
    %v577 = vmax.f32 %v440, 0.0
    %v578 = vmax.f32 %v443, 0.0
    %v579 = vmax.f32 %v445, 0.0
    %v580 = vmax.f32 %v448, 0.0
    %v581 = vmax.f32 %v450, 0.0
    %v582 = vmax.f32 %v453, 0.0
    %v583 = vmax.f32 %v455, 0.0
    %v584 = vmax.f32 %v458, 0.0
    %v585 = vmax.f32 %v460, 0.0
    %v586 = vmax.f32 %v463, 0.0
    %v587 = vmax.f32 %v465, 0.0
    %v588 = vmax.f32 %v468, 0.0
    %v589 = vmax.f32 %v470, 0.0
    %v590 = vmax.f32 %v473, 0.0
    %v591 = vmax.f32 %v475, 0.0
    %v592 = vmax.f32 %v478, 0.0
    %v593 = vmax.f32 %v480, 0.0
    %v594 = vmax.f32 %v483, 0.0
    %v595 = vmax.f32 %v485, 0.0
    %v596 = vmax.f32 %v488, 0.0
    %v597 = vmax.f32 %v490, 0.0
    %v598 = vmax.f32 %v493, 0.0
    %v599 = vmax.f32 %v495, 0.0
    %v600 = vmax.f32 %v498, 0.0
    %v601 = vmax.f32 %v500, 0.0
    %v602 = vmax.f32 %v503, 0.0
    %v603 = vmax.f32 %v505, 0.0
    %v604 = vmax.f32 %v508, 0.0
    %v605 = vmax.f32 %v510, 0.0
    %v606 = vmax.f32 %v513, 0.0
    %v607 = vmax.f32 %v515, 0.0
    %v608 = vmax.f32 %v518, 0.0
    %v609 = vmax.f32 %v520, 0.0
    %v610 = vmax.f32 %v523, 0.0
    %v611 = vmax.f32 %v525, 0.0
    %v612 = vmax.f32 %v528, 0.0
    %v613 = vmax.f32 %v530, 0.0
    %v614 = vmax.f32 %v533, 0.0
    %v615 = vmax.f32 %v535, 0.0
    %v616 = vmax.f32 %v538, 0.0
    %v617 = vmax.f32 %v540, 0.0
    %v618 = vmax.f32 %v543, 0.0
    %v619 = vmax.f32 %v545, 0.0
    %v620 = vmax.f32 %v548, 0.0
    %v621 = vmax.f32 %v550, 0.0
    %v622 = vmax.f32 %v553, 0.0
    %v623 = vmax.f32 %v555, 0.0
    %v624 = vmax.f32 %v558, 0.0
    %v625 = vmax.f32 %v560, 0.0
    %vm626 = vcmask 130048
    %v627 = vsel %vm626, %v562, 0.0
    %v628 = vsel %vm626, %v563, 0.0
    %v629 = vadd.f32 %v627, %v628
    %v630 = vsel %vm626, %v564, 0.0
    %v631 = vadd.f32 %v629, %v630
    %v632 = vsel %vm626, %v565, 0.0
    %v633 = vadd.f32 %v631, %v632
    %v634 = vsel %vm626, %v566, 0.0
    %v635 = vadd.f32 %v633, %v634
    %v636 = vsel %vm626, %v567, 0.0
    %v637 = vadd.f32 %v635, %v636
    %v638 = vsel %vm626, %v568, 0.0
    %v639 = vadd.f32 %v637, %v638
    %v640 = vsel %vm626, %v569, 0.0
    %v641 = vadd.f32 %v639, %v640
    %v642 = vsel %vm626, %v570, 0.0
    %v643 = vadd.f32 %v641, %v642
    %v644 = vsel %vm626, %v571, 0.0
    %v645 = vadd.f32 %v643, %v644
    %v646 = vsel %vm626, %v572, 0.0
    %v647 = vadd.f32 %v645, %v646
    %v648 = vsel %vm626, %v573, 0.0
    %v649 = vadd.f32 %v647, %v648
    %v650 = vsel %vm626, %v574, 0.0
    %v651 = vadd.f32 %v649, %v650
    %v652 = vsel %vm626, %v575, 0.0
    %v653 = vadd.f32 %v651, %v652
    %v654 = vsel %vm626, %v576, 0.0
    %v655 = vadd.f32 %v653, %v654
    %v656 = vsel %vm626, %v577, 0.0
    %v657 = vadd.f32 %v655, %v656
    %v658 = vsel %vm626, %v578, 0.0
    %v659 = vadd.f32 %v657, %v658
    %v660 = vsel %vm626, %v579, 0.0
    %v661 = vadd.f32 %v659, %v660
    %v662 = vsel %vm626, %v580, 0.0
    %v663 = vadd.f32 %v661, %v662
    %v664 = vsel %vm626, %v581, 0.0
    %v665 = vadd.f32 %v663, %v664
    %v666 = vsel %vm626, %v582, 0.0
    %v667 = vadd.f32 %v665, %v666
    %v668 = vsel %vm626, %v583, 0.0
    %v669 = vadd.f32 %v667, %v668
    %v670 = vsel %vm626, %v584, 0.0
    %v671 = vadd.f32 %v669, %v670
    %v672 = vsel %vm626, %v585, 0.0
    %v673 = vadd.f32 %v671, %v672
    %v674 = vsel %vm626, %v586, 0.0
    %v675 = vadd.f32 %v673, %v674
    %v676 = vsel %vm626, %v587, 0.0
    %v677 = vadd.f32 %v675, %v676
    %v678 = vsel %vm626, %v588, 0.0
    %v679 = vadd.f32 %v677, %v678
    %v680 = vsel %vm626, %v589, 0.0
    %v681 = vadd.f32 %v679, %v680
    %v682 = vsel %vm626, %v590, 0.0
    %v683 = vadd.f32 %v681, %v682
    %v684 = vsel %vm626, %v591, 0.0
    %v685 = vadd.f32 %v683, %v684
    %v686 = vsel %vm626, %v592, 0.0
    %v687 = vadd.f32 %v685, %v686
    %v688 = vsel %vm626, %v593, 0.0
    %v689 = vadd.f32 %v687, %v688
    %v690 = vrot.slane %v689, 4
    %v691 = vadd.f32 %v689, %v690
    %v692 = vrot.slane %v691, 2
    %v693 = vadd.f32 %v691, %v692
    %v694 = vrot.slane %v693, 1
    %v695 = vadd.f32 %v693, %v694
    %v696 = vsel %vm626, %v594, 0.0
    %v697 = vsel %vm626, %v595, 0.0
    %v698 = vadd.f32 %v696, %v697
    %v699 = vsel %vm626, %v596, 0.0
    %v700 = vadd.f32 %v698, %v699
    %v701 = vsel %vm626, %v597, 0.0
    %v702 = vadd.f32 %v700, %v701
    %v703 = vsel %vm626, %v598, 0.0
    %v704 = vadd.f32 %v702, %v703
    %v705 = vsel %vm626, %v599, 0.0
    %v706 = vadd.f32 %v704, %v705
    %v707 = vsel %vm626, %v600, 0.0
    %v708 = vadd.f32 %v706, %v707
    %v709 = vsel %vm626, %v601, 0.0
    %v710 = vadd.f32 %v708, %v709
    %v711 = vsel %vm626, %v602, 0.0
    %v712 = vadd.f32 %v710, %v711
    %v713 = vsel %vm626, %v603, 0.0
    %v714 = vadd.f32 %v712, %v713
    %v715 = vsel %vm626, %v604, 0.0
    %v716 = vadd.f32 %v714, %v715
    %v717 = vsel %vm626, %v605, 0.0
    %v718 = vadd.f32 %v716, %v717
    %v719 = vsel %vm626, %v606, 0.0
    %v720 = vadd.f32 %v718, %v719
    %v721 = vsel %vm626, %v607, 0.0
    %v722 = vadd.f32 %v720, %v721
    %v723 = vsel %vm626, %v608, 0.0
    %v724 = vadd.f32 %v722, %v723
    %v725 = vsel %vm626, %v609, 0.0
    %v726 = vadd.f32 %v724, %v725
    %v727 = vsel %vm626, %v610, 0.0
    %v728 = vadd.f32 %v726, %v727
    %v729 = vsel %vm626, %v611, 0.0
    %v730 = vadd.f32 %v728, %v729
    %v731 = vsel %vm626, %v612, 0.0
    %v732 = vadd.f32 %v730, %v731
    %v733 = vsel %vm626, %v613, 0.0
    %v734 = vadd.f32 %v732, %v733
    %v735 = vsel %vm626, %v614, 0.0
    %v736 = vadd.f32 %v734, %v735
    %v737 = vsel %vm626, %v615, 0.0
    %v738 = vadd.f32 %v736, %v737
    %v739 = vsel %vm626, %v616, 0.0
    %v740 = vadd.f32 %v738, %v739
    %v741 = vsel %vm626, %v617, 0.0
    %v742 = vadd.f32 %v740, %v741
    %v743 = vsel %vm626, %v618, 0.0
    %v744 = vadd.f32 %v742, %v743
    %v745 = vsel %vm626, %v619, 0.0
    %v746 = vadd.f32 %v744, %v745
    %v747 = vsel %vm626, %v620, 0.0
    %v748 = vadd.f32 %v746, %v747
    %v749 = vsel %vm626, %v621, 0.0
    %v750 = vadd.f32 %v748, %v749
    %v751 = vsel %vm626, %v622, 0.0
    %v752 = vadd.f32 %v750, %v751
    %v753 = vsel %vm626, %v623, 0.0
    %v754 = vadd.f32 %v752, %v753
    %v755 = vsel %vm626, %v624, 0.0
    %v756 = vadd.f32 %v754, %v755
    %v757 = vsel %vm626, %v625, 0.0
    %v758 = vadd.f32 %v756, %v757
    %v759 = vrot.slane %v758, 4
    %v760 = vadd.f32 %v758, %v759
    %v761 = vrot.slane %v760, 2
    %v762 = vadd.f32 %v760, %v761
    %v763 = vrot.slane %v762, 1
    %v764 = vadd.f32 %v762, %v763
    %v765 = vld [vmem:[%s3] sm:$0xff]
    %v766 = vld [vmem:[%s3 + $0x8] sm:$0xff]
    %v767 = vld [vmem:[%s4] sm:$0x1]
    %v769 = vperm.slane %v767, 0
    %vm773 = vcmask 1041409
    %v774 = vsel %vm773, %v764, %v695
    %v775 = vsel %vm626, %v774, 0
    %777 = vmatpush.msra.mxu0 0.0
    %778 = vmatpush.msra.mxu0 0.0
    %779 = vmatpush.msra.mxu0 0.0
    %780 = vmatpush.msra.mxu0 0.0
    %781 = vmatpush.msra.mxu0 0.0
    %782 = vmatpush.msra.mxu0 0.0
    %783 = vmatpush.msra.mxu0 0.0
    %784 = vmatpush.msra.mxu0 0.0
    %785 = vmatpush.msra.mxu0 0.0
    %786 = vmatpush.msra.mxu0 0.0
    %787 = vmatpush.msra.mxu0 0.0
    %788 = vmatpush.msra.mxu0 0.0
    %789 = vmatpush.msra.mxu0 0.0
    %790 = vmatpush.msra.mxu0 0.0
    %791 = vmatpush.msra.mxu0 %v766
    %792 = vmatpush.msra.mxu0 %v765
    %793 = vmatmul.f32.gmra.mxu0 %v775
    %v794 = vpop.f32.mrf.mxu0
    %v795 = vadd.f32 %v769, %v794
    %796 = vdwg.mxu0
    %v797 = vmax.f32 %v795, 0.0
    %v798 = vld [vmem:[%s5] sm:$0xff]
    %v799 = vld [vmem:[%s5 + $0x8] sm:$0xff]
    %v800 = vld [vmem:[%s5 + $0x10] sm:$0xff]
    %v801 = vld [vmem:[%s5 + $0x18] sm:$0xff]
    %v802 = vld [vmem:[%s6] sm:$0x1]
    %v804 = vperm.slane %v802, 0
    %vm806 = vcmask 261120
    %v808 = vsel %vm806, %v797, 0
    %810 = vmatpush.msra.mxu0 0.0
    %811 = vmatpush.msra.mxu0 0.0
    %812 = vmatpush.msra.mxu0 0.0
    %813 = vmatpush.msra.mxu0 0.0
    %814 = vmatpush.msra.mxu0 0.0
    %815 = vmatpush.msra.mxu0 0.0
    %816 = vmatpush.msra.mxu0 0.0
    %817 = vmatpush.msra.mxu0 0.0
    %818 = vmatpush.msra.mxu0 0.0
    %819 = vmatpush.msra.mxu0 0.0
    %820 = vmatpush.msra.mxu0 0.0
    %821 = vmatpush.msra.mxu0 0.0
    %822 = vmatpush.msra.mxu0 %v801
    %823 = vmatpush.msra.mxu0 %v800
    %824 = vmatpush.msra.mxu0 %v799
    %825 = vmatpush.msra.mxu0 %v798
    %826 = vmatmul.f32.gmra.mxu0 %v808
    %v827 = vpop.f32.mrf.mxu0
    %v828 = vadd.f32 %v804, %v827
    %829 = vdwg.mxu0
    %vm830 = vcmask 58368
    %831 = vst.msk [vmem:[#allocation2] sm:$0x3] %vm830, %v828
    // Predicated region
    $region30: #{tpu_custom_call.1} parent=1 // pred_check
      _
    $region31: #{tpu_custom_call.1} parent=1 // pred_check_branch
      %833 = sbr.rel (0) target = $region33
    $region32: #{tpu_custom_call.1} parent=1 // pred_region
      %835 = vsyncadd [#allocation3], 0
      %s837 = sshll.u32 [#allocation2], 4
      %s838 = int_to_ptr.vmem [resolvable:$true] %s837
      %s839 = sshll.u32 %s7, 4
      %s840 = int_to_ptr.hbm [resolvable:$true] %s839
      %842 = dma.vmem_to_hbm [thread:$0]  %s838, 32, %s840, [#allocation3]
    $region33: #{tpu_custom_call.1} parent=1 // pred_fallthru
      _
    // Predicated region
    $region34: #{tpu_custom_call.1} parent=1 // pred_check
      _
    $region35: #{tpu_custom_call.1} parent=1 // pred_check_branch
      %844 = sbr.rel (0) target = $region37
    $region36: #{tpu_custom_call.1} parent=1 // pred_region
      %846 = dma.done [#allocation3], 32
    $region37: #{tpu_custom_call.1} parent=1 // pred_fallthru
      _
    %847 = vsyncpa [#allocation3], 1

</llo_original>
